<compile_context>
chip_gen: v7x
topology: tpu7x:2x2x1
jax: 0.10.0
libtpu: 0.0.40
codegen_flags: <defaults>
</compile_context>

<pallas_src>
import functools
import inspect

import jax
import jax.numpy as jnp
from jax.experimental import pallas as pl
from jax.experimental.pallas import tpu as pltpu


def _round_up(n, m):
    return ((n + m - 1) // m) * m


def _vmem_rows(n):          # physical VMEM layout: second-minor dim pads to 8
    return _round_up(max(int(n), 1), 8)


def _vmem_cols(n):          # physical VMEM layout: minor dim pads to 128 lanes
    return _round_up(max(int(n), 1), 128)


def _supports_pipeline_mode():
    """Narrow API probe for BlockSpec(pipeline_mode=pl.Buffered(...))."""
    if not hasattr(pl, "Buffered"):
        return False
    try:
        return "pipeline_mode" in inspect.signature(pl.BlockSpec).parameters
    except (TypeError, ValueError):
        return False


_HAS_BUFFERED = _supports_pipeline_mode()


def _vmem_capacity_bytes():
    """Per-core VMEM capacity; conservative 64 MiB (v7x) if the query is unavailable."""
    default = 64 * 1024 * 1024
    if not hasattr(pltpu, "get_tpu_info"):
        return default
    try:
        return int(pltpu.get_tpu_info().vmem_capacity_bytes)
    except Exception:  # capacity probe only -- must never turn into a kernel failure
        return default


def mlp_kernel(x_ref, w0_ref, b0_ref, wh_ref, bh_ref, wo_ref, bo_ref, o_ref,
               *, num_hidden_layers):
    """Whole MLP forward for one batch tile, entirely in VMEM (>= 1 hidden layer)."""
    cdt = w0_ref.dtype                       # MXU operand dtype (bf16 by default)
    x = x_ref[...]
    if x.dtype != cdt:
        x = x.astype(cdt)

    def layer(h_f32, w, b):
        hh = jnp.dot(h_f32.astype(cdt), w, preferred_element_type=jnp.float32) + b
        return jnp.maximum(hh, 0.0)

    h = jnp.dot(x, w0_ref[...], preferred_element_type=jnp.float32) + b0_ref[...]
    h = jnp.maximum(h, 0.0)

    if num_hidden_layers <= 8:
        # Static unroll: the scheduler overlaps cast/bias/ReLU with the next matmul.
        for i in range(num_hidden_layers):
            h = layer(h, wh_ref[i], bh_ref[i])
    else:
        # Very deep stacks: partially unrolled fori_loop keeps one layer live.
        h = jax.lax.fori_loop(
            0, num_hidden_layers,
            lambda i, hh: layer(hh, wh_ref[i], bh_ref[i]),
            h, unroll=2)

    o_ref[...] = (jnp.dot(h.astype(cdt), wo_ref[...],
                          preferred_element_type=jnp.float32)
                  + bo_ref[...]).astype(o_ref.dtype)


def mlp_kernel_no_hidden(x_ref, w0_ref, b0_ref, wo_ref, bo_ref, o_ref):
    """Variant for num_hidden_layers == 0 (avoids zero-sized weight blocks)."""
    cdt = w0_ref.dtype
    x = x_ref[...]
    if x.dtype != cdt:
        x = x.astype(cdt)
    h = jnp.dot(x, w0_ref[...], preferred_element_type=jnp.float32) + b0_ref[...]
    h = jnp.maximum(h, 0.0)
    o_ref[...] = (jnp.dot(h.astype(cdt), wo_ref[...],
                          preferred_element_type=jnp.float32)
                  + bo_ref[...]).astype(o_ref.dtype)


def mlp_forward(x, params, *, batch_tile=None, single_buffer_weights=True):
    """x: (batch, *trailing) -> flattened to (batch, num_inputs). Returns f32 (batch, num_out)."""
    w0, b0, wh, bh, wo, bo = params
    B = x.shape[0]
    x2 = x.reshape(B, -1)                 # nn.Flatten; dtype kept as produced (bf16 ok)
    num_inputs = x2.shape[1]
    hidden = w0.shape[1]
    num_out = wo.shape[1]
    L = wh.shape[0]

    x_item = jnp.dtype(x2.dtype).itemsize
    w_item = jnp.dtype(w0.dtype).itemsize

    # ---- batch tile -------------------------------------------------------
    B8 = _round_up(B, 8)
    if batch_tile is None:
        # Per-grid-step overhead ~0.35 us: size the tile so each step streams
        # ~2 MiB of x (clamped to [256, 4096] rows, multiple of 8 sublanes).
        tb = (2 * 1024 * 1024) // max(1, num_inputs * x_item)
        tb = _round_up(min(4096, max(256, tb)), 8)
    else:
        tb = _round_up(max(int(batch_tile), 8), 8)
    # Keep >= 2 grid steps when the batch allows it so dimension_semantics=
    # ("parallel",) can use both TensorCores on v7x (harmless on v5e/v6e).
    if tb >= B8 and B8 >= 16:
        tb = _round_up(pl.cdiv(B8, 2), 8)
    tb = min(tb, B8)
    B_pad = _round_up(B, tb)
    if B_pad != B:
        x2 = jnp.pad(x2, ((0, B_pad - B), (0, 0)))
    grid = (B_pad // tb,)

    # ---- VMEM budget ------------------------------------------------------
    # Resident weight/bias bytes in physical VMEM layout (rows->8, lanes->128).
    w_bytes = (_vmem_rows(num_inputs) * _vmem_cols(hidden) * w_item
               + L * _vmem_rows(hidden) * _vmem_cols(hidden) * w_item
               + _vmem_rows(hidden) * _vmem_cols(num_out) * w_item
               + (L + 1) * 8 * _vmem_cols(hidden) * 4
               + 8 * _vmem_cols(num_out) * 4)
    # Single-buffer the weight blocks only when it saves real VMEM and the API
    # supports it (constant index_map => a second buffer is pure waste).
    use_single_buffer = (single_buffer_weights and _HAS_BUFFERED
                         and w_bytes > 4 * 1024 * 1024)
    x_bytes = 2 * tb * _vmem_cols(num_inputs) * x_item          # double-buffered input
    o_bytes = 2 * tb * _vmem_cols(num_out) * 4                   # double-buffered output
    act_bytes = 4 * tb * _vmem_cols(hidden) * 4                  # h + temporaries
    need = x_bytes + o_bytes + act_bytes + (1 if use_single_buffer else 2) * w_bytes

    cap = (85 * _vmem_capacity_bytes()) // 100                   # headroom for Mosaic scratch
    if need > cap:
        # TODO(synk): very large weight stacks would need a layer-streaming
        # "arbitrary" grid axis (one (1,hidden,hidden) block per step); not
        # needed for this module's configuration.
        raise ValueError(
            f"Resident MLP layout needs ~{need >> 20} MiB VMEM but only ~{cap >> 20} MiB is "
            "budgeted; reduce batch_tile or stream the hidden-layer weights.")
    vmem_limit = int(min(cap, max(32 * 1024 * 1024, 2 * need)))

    # ---- specs ------------------------------------------------------------
    def wspec(shape):
        idx = lambda *_: (0,) * len(shape)
        if use_single_buffer:
            return pl.BlockSpec(shape, idx, pipeline_mode=pl.Buffered(1))
        return pl.BlockSpec(shape, idx)

    x_spec = pl.BlockSpec((tb, num_inputs), lambda i: (i, 0))
    # Output written unpadded: num_out (<128) lanes -> masked vst, but the HBM
    # write carries only real bytes (vs 16x waste with a 128-lane zero pad).
    o_spec = pl.BlockSpec((tb, num_out), lambda i: (i, 0))

    if L > 0:
        kernel = functools.partial(mlp_kernel, num_hidden_layers=L)
        in_specs = [x_spec,
                    wspec((num_inputs, hidden)), wspec((1, hidden)),
                    wspec((L, hidden, hidden)), wspec((L, 1, hidden)),
                    wspec((hidden, num_out)), wspec((1, num_out))]
        args = (x2, w0, b0, wh, bh, wo, bo)
    else:
        kernel = mlp_kernel_no_hidden
        in_specs = [x_spec,
                    wspec((num_inputs, hidden)), wspec((1, hidden)),
                    wspec((hidden, num_out)), wspec((1, num_out))]
        args = (x2, w0, b0, wo, bo)

    y = pl.pallas_call(
        kernel,
        out_shape=jax.ShapeDtypeStruct((B_pad, num_out), jnp.float32),
        grid_spec=pltpu.PrefetchScalarGridSpec(
            num_scalar_prefetch=0,
            grid=grid,
            in_specs=in_specs,
            out_specs=o_spec),
        compiler_params=pltpu.CompilerParams(
            dimension_semantics=("parallel",),
            vmem_limit_bytes=vmem_limit),
    )(*args)
    return y[:B]


def init_params(key, num_inputs, num_outputs, hidden, num_hidden_layers,
                weight_dtype=jnp.bfloat16):
    """PyTorch-style U(-1/sqrt(fan_in), +1/sqrt(fan_in)) init.  Weights are
    pre-transposed to (in, out) and stored in `weight_dtype` (bf16 = MXU-native
    operands, half the DMA bytes); biases stay f32 and are added after the f32
    accumulation.  Pass weight_dtype=jnp.float32 for full-f32 fidelity."""
    def linear(k, fan_in, fan_out):
        kw, kb = jax.random.split(k)
        bound = 1.0 / jnp.sqrt(fan_in)
        w = jax.random.uniform(kw, (fan_in, fan_out), jnp.float32, -bound, bound)
        b = jax.random.uniform(kb, (1, fan_out), jnp.float32, -bound, bound)
        return w.astype(weight_dtype), b

    keys = jax.random.split(key, num_hidden_layers + 2)
    w0, b0 = linear(keys[0], num_inputs, hidden)
    whs, bhs = [], []
    for i in range(num_hidden_layers):
        w, b = linear(keys[1 + i], hidden, hidden)
        whs.append(w)
        bhs.append(b)
    wh = (jnp.stack(whs) if num_hidden_layers > 0
          else jnp.zeros((0, hidden, hidden), weight_dtype))
    bh = (jnp.stack(bhs) if num_hidden_layers > 0
          else jnp.zeros((0, 1, hidden), jnp.float32))
    wo, bo = linear(keys[-1], hidden, num_outputs)
    return w0, b0, wh, bh, wo, bo


def reference_forward(x, params):
    """Pure-JAX reference with the same numerics (weight-dtype dot operands, f32 accum)."""
    w0, b0, wh, bh, wo, bo = params
    cdt = w0.dtype

    def lin(h, w, b):
        return jnp.dot(h.astype(cdt), w.astype(cdt),
                       preferred_element_type=jnp.float32) + b

    h = x.reshape(x.shape[0], -1)
    h = jnp.maximum(lin(h, w0, b0), 0.0)
    for i in range(wh.shape[0]):
        h = jnp.maximum(lin(h, wh[i], bh[i]), 0.0)
    return lin(h, wo, bo)


if __name__ == "__main__":
    # Module configuration: num_inputs=32, num_hidden_neurons=32,
    # num_hidden_layers=2, num_outputs=8 (dropout_prob=1 -> no dropout layers).
    num_inputs, num_outputs = 32, 8
    hidden, num_hidden_layers = 32, 2
    batch = 64

    key = jax.random.PRNGKey(0)
    k_x, k_p = jax.random.split(key)

    # Input shaped (batch, 4, 8); nn.Flatten collapses trailing dims to 32.
    # (bf16 inputs from an upstream producer would be consumed as-is.)
    x = jax.random.normal(k_x, (batch, 4, 8), dtype=jnp.float32)
    params = init_params(k_p, num_inputs, num_outputs, hidden, num_hidden_layers)

    # Default tiling: each grid step streams ~2 MiB of x, and small batches are
    # split into >= 2 "parallel" steps so v7x's two TensorCores both get work.
    fwd = jax.jit(lambda xx: mlp_forward(xx, params))
    y = jax.block_until_ready(fwd(x))

    y_ref = reference_forward(x, params)
    assert y.shape == (batch, num_outputs)
    assert jnp.allclose(y, y_ref, atol=2e-3, rtol=2e-3), "mismatch vs reference"

    # TODO(synk): nn.Dropout branch (dropout_prob != 1) is not implemented; the
    # module's default configuration (no dropout) is what this kernel covers.
    print("KERNEL_OK")
</pallas_src>

<mosaic_0001>
module attributes {stable_mosaic.version = 11 : i64} {
  func.func @mlp_kernel(%arg0: i32, %arg1: memref<32x32xf32, #tpu.memory_space<vmem>>, %arg2: memref<32x32xbf16, #tpu.memory_space<vmem>>, %arg3: memref<1x32xf32, #tpu.memory_space<vmem>>, %arg4: memref<2x32x32xbf16, #tpu.memory_space<vmem>>, %arg5: memref<2x1x32xf32, #tpu.memory_space<vmem>>, %arg6: memref<32x8xbf16, #tpu.memory_space<vmem>>, %arg7: memref<1x8xf32, #tpu.memory_space<vmem>>, %arg8: memref<32x8xf32, #tpu.memory_space<vmem>>) attributes {dimension_semantics = [#tpu.dimension_semantics<parallel>], iteration_bounds = array<i64: 2>, scalar_prefetch = 0 : i64, scratch_operands = 0 : i64, tpu.core_type = #tpu.core_type<tc>, window_params = [{transform_indices = @transform_0, window_bounds = array<i64: 32, 32>}, {pipeline_mode = #tpu.pipeline_mode<synchronous>, transform_indices = @transform_1, window_bounds = array<i64: 32, 32>}, {pipeline_mode = #tpu.pipeline_mode<synchronous>, transform_indices = @transform_2, window_bounds = array<i64: 1, 32>}, {pipeline_mode = #tpu.pipeline_mode<synchronous>, transform_indices = @transform_3, window_bounds = array<i64: 2, 32, 32>}, {pipeline_mode = #tpu.pipeline_mode<synchronous>, transform_indices = @transform_4, window_bounds = array<i64: 2, 1, 32>}, {pipeline_mode = #tpu.pipeline_mode<synchronous>, transform_indices = @transform_5, window_bounds = array<i64: 32, 8>}, {pipeline_mode = #tpu.pipeline_mode<synchronous>, transform_indices = @transform_6, window_bounds = array<i64: 1, 8>}, {transform_indices = @transform_7, window_bounds = array<i64: 32, 8>}]} {
    %c0 = arith.constant 0 : index
    %c0_0 = arith.constant 0 : index
    %0 = vector.load %arg1[%c0, %c0_0] : memref<32x32xf32, #tpu.memory_space<vmem>>, vector<32x32xf32>
    %1 = arith.truncf %0 : vector<32x32xf32> to vector<32x32xbf16>
    %c0_1 = arith.constant 0 : index
    %c0_2 = arith.constant 0 : index
    %2 = vector.load %arg2[%c0_1, %c0_2] : memref<32x32xbf16, #tpu.memory_space<vmem>>, vector<32x32xbf16>
    %cst = arith.constant dense<0.000000e+00> : vector<32x32xf32>
    %3 = tpu.matmul %1, %2, %cst {dimension_numbers = #tpu.dot_dimension_numbers<[1], [0], [0], [1], [0, 0, 1, 1], [], []>} : vector<32x32xbf16>, vector<32x32xbf16>, vector<32x32xf32> -> vector<32x32xf32>
    %c0_3 = arith.constant 0 : index
    %c0_4 = arith.constant 0 : index
    %4 = vector.load %arg3[%c0_3, %c0_4] : memref<1x32xf32, #tpu.memory_space<vmem>>, vector<1x32xf32>
    %5 = vector.broadcast %4 : vector<1x32xf32> to vector<32x32xf32>
    %6 = arith.addf %3, %5 : vector<32x32xf32>
    %cst_5 = arith.constant 0.000000e+00 : f32
    %7 = vector.broadcast %cst_5 : f32 to vector<32x32xf32>
    %8 = arith.maximumf %6, %7 : vector<32x32xf32>
    %c0_6 = arith.constant 0 : index
    %c0_7 = arith.constant 0 : index
    %c0_8 = arith.constant 0 : index
    %9 = vector.load %arg4[%c0_6, %c0_7, %c0_8] : memref<2x32x32xbf16, #tpu.memory_space<vmem>>, vector<1x32x32xbf16>
    %10 = vector.shape_cast %9 : vector<1x32x32xbf16> to vector<32x32xbf16>
    %c0_9 = arith.constant 0 : index
    %c0_10 = arith.constant 0 : index
    %c0_11 = arith.constant 0 : index
    %11 = vector.load %arg5[%c0_9, %c0_10, %c0_11] : memref<2x1x32xf32, #tpu.memory_space<vmem>>, vector<1x1x32xf32>
    %12 = vector.shape_cast %11 : vector<1x1x32xf32> to vector<1x32xf32>
    %13 = arith.truncf %8 : vector<32x32xf32> to vector<32x32xbf16>
    %cst_12 = arith.constant dense<0.000000e+00> : vector<32x32xf32>
    %14 = tpu.matmul %13, %10, %cst_12 {dimension_numbers = #tpu.dot_dimension_numbers<[1], [0], [0], [1], [0, 0, 1, 1], [], []>} : vector<32x32xbf16>, vector<32x32xbf16>, vector<32x32xf32> -> vector<32x32xf32>
    %15 = vector.broadcast %12 : vector<1x32xf32> to vector<32x32xf32>
    %16 = arith.addf %14, %15 : vector<32x32xf32>
    %cst_13 = arith.constant 0.000000e+00 : f32
    %17 = vector.broadcast %cst_13 : f32 to vector<32x32xf32>
    %18 = arith.maximumf %16, %17 : vector<32x32xf32>
    %c1 = arith.constant 1 : index
    %c0_14 = arith.constant 0 : index
    %c0_15 = arith.constant 0 : index
    %19 = vector.load %arg4[%c1, %c0_14, %c0_15] : memref<2x32x32xbf16, #tpu.memory_space<vmem>>, vector<1x32x32xbf16>
    %20 = vector.shape_cast %19 : vector<1x32x32xbf16> to vector<32x32xbf16>
    %c1_16 = arith.constant 1 : index
    %c0_17 = arith.constant 0 : index
    %c0_18 = arith.constant 0 : index
    %21 = vector.load %arg5[%c1_16, %c0_17, %c0_18] : memref<2x1x32xf32, #tpu.memory_space<vmem>>, vector<1x1x32xf32>
    %22 = vector.shape_cast %21 : vector<1x1x32xf32> to vector<1x32xf32>
    %23 = arith.truncf %18 : vector<32x32xf32> to vector<32x32xbf16>
    %cst_19 = arith.constant dense<0.000000e+00> : vector<32x32xf32>
    %24 = tpu.matmul %23, %20, %cst_19 {dimension_numbers = #tpu.dot_dimension_numbers<[1], [0], [0], [1], [0, 0, 1, 1], [], []>} : vector<32x32xbf16>, vector<32x32xbf16>, vector<32x32xf32> -> vector<32x32xf32>
    %25 = vector.broadcast %22 : vector<1x32xf32> to vector<32x32xf32>
    %26 = arith.addf %24, %25 : vector<32x32xf32>
    %cst_20 = arith.constant 0.000000e+00 : f32
    %27 = vector.broadcast %cst_20 : f32 to vector<32x32xf32>
    %28 = arith.maximumf %26, %27 : vector<32x32xf32>
    %29 = arith.truncf %28 : vector<32x32xf32> to vector<32x32xbf16>
    %c0_21 = arith.constant 0 : index
    %c0_22 = arith.constant 0 : index
    %30 = vector.load %arg6[%c0_21, %c0_22] : memref<32x8xbf16, #tpu.memory_space<vmem>>, vector<32x8xbf16>
    %cst_23 = arith.constant dense<0.000000e+00> : vector<32x8xf32>
    %31 = tpu.matmul %29, %30, %cst_23 {dimension_numbers = #tpu.dot_dimension_numbers<[1], [0], [0], [1], [0, 0, 1, 1], [], []>} : vector<32x32xbf16>, vector<32x8xbf16>, vector<32x8xf32> -> vector<32x8xf32>
    %c0_24 = arith.constant 0 : index
    %c0_25 = arith.constant 0 : index
    %32 = vector.load %arg7[%c0_24, %c0_25] : memref<1x8xf32, #tpu.memory_space<vmem>>, vector<1x8xf32>
    %33 = vector.broadcast %32 : vector<1x8xf32> to vector<32x8xf32>
    %34 = arith.addf %31, %33 : vector<32x8xf32>
    %c0_26 = arith.constant 0 : index
    %c0_27 = arith.constant 0 : index
    %35 = vector.load %arg8[%c0_26, %c0_27] : memref<32x8xf32, #tpu.memory_space<vmem>>, vector<32x8xf32>
    tpu.vector_store %arg8[%c0_26, %c0_27], %34 {strides = array<i32>} : memref<32x8xf32, #tpu.memory_space<vmem>>, vector<32x8xf32>,
    return
  }
  func.func @transform_0(%arg0: i32) -> (i32, i32) {
    %c0_i32 = arith.constant 0 : i32
    %c0_i32_0 = arith.constant 0 : i32
    return %arg0, %c0_i32 : i32, i32
  }
  func.func @transform_1(%arg0: i32) -> (i32, i32) {
    %c0_i32 = arith.constant 0 : i32
    %c0_i32_0 = arith.constant 0 : i32
    %c0_i32_1 = arith.constant 0 : i32
    return %c0_i32, %c0_i32_0 : i32, i32
  }
  func.func @transform_2(%arg0: i32) -> (i32, i32) {
    %c0_i32 = arith.constant 0 : i32
    %c0_i32_0 = arith.constant 0 : i32
    %c0_i32_1 = arith.constant 0 : i32
    return %c0_i32, %c0_i32_0 : i32, i32
  }
  func.func @transform_3(%arg0: i32) -> (i32, i32, i32) {
    %c0_i32 = arith.constant 0 : i32
    %c0_i32_0 = arith.constant 0 : i32
    %c0_i32_1 = arith.constant 0 : i32
    %c0_i32_2 = arith.constant 0 : i32
    return %c0_i32, %c0_i32_0, %c0_i32_1 : i32, i32, i32
  }
  func.func @transform_4(%arg0: i32) -> (i32, i32, i32) {
    %c0_i32 = arith.constant 0 : i32
    %c0_i32_0 = arith.constant 0 : i32
    %c0_i32_1 = arith.constant 0 : i32
    %c0_i32_2 = arith.constant 0 : i32
    return %c0_i32, %c0_i32_0, %c0_i32_1 : i32, i32, i32
  }
  func.func @transform_5(%arg0: i32) -> (i32, i32) {
    %c0_i32 = arith.constant 0 : i32
    %c0_i32_0 = arith.constant 0 : i32
    %c0_i32_1 = arith.constant 0 : i32
    return %c0_i32, %c0_i32_0 : i32, i32
  }
  func.func @transform_6(%arg0: i32) -> (i32, i32) {
    %c0_i32 = arith.constant 0 : i32
    %c0_i32_0 = arith.constant 0 : i32
    %c0_i32_1 = arith.constant 0 : i32
    return %c0_i32, %c0_i32_0 : i32, i32
  }
  func.func @transform_7(%arg0: i32) -> (i32, i32) {
    %c0_i32 = arith.constant 0 : i32
    %c0_i32_0 = arith.constant 0 : i32
    return %arg0, %c0_i32 : i32, i32
  }
}

</mosaic_0001>

<llo_original>
// kernel: _lambda_.1
$region0: #{_lambda_.1}
  #allocation0 [shape = 'u32[]', space=smem, size = 0x4, offset = 0x4, fixed_abs, tag = 'smem constant byte address 0x4 - core index']
  #allocation1 [shape = 'u32[144,128]{1,0:T(1,128)}', space=vmem, size = 0x12000, scoped, tag = 'internal scratch']
  %s0 = inlined_call_operand.vmem [shape: f32[64,32], index: 0, kind: input, shape index: {}]
  %s1 = inlined_call_operand.vmem [shape: bf16[32,32], index: 1, kind: input, shape index: {}]
  %s2 = inlined_call_operand.vmem [shape: f32[1,32], index: 2, kind: input, shape index: {}]
  %s3 = inlined_call_operand.vmem [shape: bf16[2,32,32], index: 3, kind: input, shape index: {}]
  %s4 = inlined_call_operand.vmem [shape: f32[2,1,32], index: 4, kind: input, shape index: {}]
  %s5 = inlined_call_operand.vmem [shape: bf16[32,8], index: 5, kind: input, shape index: {}]
  %s6 = inlined_call_operand.vmem [shape: f32[1,8], index: 6, kind: input, shape index: {}]
  %s7 = inlined_call_operand.vmem [shape: f32[64,8], index: 7, kind: output, shape index: {}]
  %s8 = sld [smem:[#allocation0]]
  $region61: #{_lambda_.1} parent=0
    _
  %s10 = ssub.s32 1, %s8
  %s11 = scalar_select 0, %s10, %s8
  loop: start=0, step=1, limit=4
  $region2: #{_lambda_.1} parent=0 // loop_pre_header
    _
  $region3: #{_lambda_.1} parent=0 // loop_header
    %s13 = sphi 0, %s17
    %p14 = scmp.ge.s32.totalorder %s13, 4
    %s23 = sphi 0, %s25
    %s26 = sphi 0, %s23
    %s27 = sphi 0, %s26
    %s43 = sphi 0, %s27
    %s47 = sphi 0, %s47
    %s49 = sphi 0, %s47
    %s50 = sphi 0, %s49
    %s64 = sphi 0, %s50
    %s68 = sphi 0, %s68
    %s70 = sphi 0, %s68
    %s71 = sphi 0, %s70
    %s85 = sphi 0, %s71
    %s89 = sphi 0, %s89
    %s91 = sphi 0, %s89
    %s92 = sphi 0, %s91
    %s106 = sphi 0, %s92
    %s110 = sphi 0, %s110
    %s112 = sphi 0, %s110
    %s113 = sphi 0, %s112
    %s127 = sphi 0, %s113
    %s131 = sphi 0, %s131
    %s133 = sphi 0, %s131
    %s134 = sphi 0, %s133
    %s148 = sphi 0, %s134
    %s152 = sphi 0, %s152
    %s154 = sphi 0, %s152
    %s155 = sphi 0, %s154
    %s169 = sphi 0, %s155
    %s175 = sphi 0, %s177
    %s178 = sphi 0, %s175
    %s179 = sphi 0, %s178
    %s195 = sphi 0, %s179
  $region4: #{_lambda_.1} parent=0 // loop_header_branch
    %16 = sbr.rel (%p14) target = $region8
  $region5: #{_lambda_.1} parent=0 // loop_body
    %s18 = ssub.s32 %s13, 1
    %s19 = ssub.s32 %s13, 2
    %s20 = sadd.s32 %s13, 1
    %s21 = ssub.s32 %s13, %s20
    %p22 = scmp.eq.s32.totalorder %s21, 0
    %s24 = sadd.s32 %s23, 1
    %s25 = scalar_select %p22, %s23, %s24
    %p28 = pneg %p22
    %p29 = scmp.eq.s32.totalorder %s13, 1
    %p30 = por %p28, %p29
    %p31 = scmp.ne.s32.totalorder %s23, %s26
    %p32 = scmp.eq.s32.totalorder %s13, 0
    %p33 = por %p31, %p32
    %p34 = scmp.ne.s32.totalorder %s23, %s26
    %p35 = scmp.eq.s32.totalorder %s18, 1
    %p36 = por %p34, %p35
    %p37 = scmp.ne.s32.totalorder %s26, %s27
    %p38 = scmp.eq.s32.totalorder %s18, 0
    %p39 = por %p37, %p38
    %p40 = scmp.ne.s32.totalorder %s26, %s27
    %p41 = scmp.eq.s32.totalorder %s19, 1
    %p42 = por %p40, %p41
    %p44 = scmp.ne.s32.totalorder %s27, %s43
    %p45 = scmp.eq.s32.totalorder %s19, 0
    %p46 = por %p44, %p45
    %s48 = sadd.s32 %s47, 1
    %p51 = scmp.eq.s32.totalorder %s13, 1
    %p52 = scmp.ne.s32.totalorder %s47, %s49
    %p53 = scmp.eq.s32.totalorder %s13, 0
    %p54 = por %p52, %p53
    %p55 = scmp.ne.s32.totalorder %s47, %s49
    %p56 = scmp.eq.s32.totalorder %s18, 1
    %p57 = por %p55, %p56
    %p58 = scmp.ne.s32.totalorder %s49, %s50
    %p59 = scmp.eq.s32.totalorder %s18, 0
    %p60 = por %p58, %p59
    %p61 = scmp.ne.s32.totalorder %s49, %s50
    %p62 = scmp.eq.s32.totalorder %s19, 1
    %p63 = por %p61, %p62
    %p65 = scmp.ne.s32.totalorder %s50, %s64
    %p66 = scmp.eq.s32.totalorder %s19, 0
    %p67 = por %p65, %p66
    %s69 = sadd.s32 %s68, 1
    %p72 = scmp.eq.s32.totalorder %s13, 1
    %p73 = scmp.ne.s32.totalorder %s68, %s70
    %p74 = scmp.eq.s32.totalorder %s13, 0
    %p75 = por %p73, %p74
    %p76 = scmp.ne.s32.totalorder %s68, %s70
    %p77 = scmp.eq.s32.totalorder %s18, 1
    %p78 = por %p76, %p77
    %p79 = scmp.ne.s32.totalorder %s70, %s71
    %p80 = scmp.eq.s32.totalorder %s18, 0
    %p81 = por %p79, %p80
    %p82 = scmp.ne.s32.totalorder %s70, %s71
    %p83 = scmp.eq.s32.totalorder %s19, 1
    %p84 = por %p82, %p83
    %p86 = scmp.ne.s32.totalorder %s71, %s85
    %p87 = scmp.eq.s32.totalorder %s19, 0
    %p88 = por %p86, %p87
    %s90 = sadd.s32 %s89, 1
    %p93 = scmp.eq.s32.totalorder %s13, 1
    %p94 = scmp.ne.s32.totalorder %s89, %s91
    %p95 = scmp.eq.s32.totalorder %s13, 0
    %p96 = por %p94, %p95
    %p97 = scmp.ne.s32.totalorder %s89, %s91
    %p98 = scmp.eq.s32.totalorder %s18, 1
    %p99 = por %p97, %p98
    %p100 = scmp.ne.s32.totalorder %s91, %s92
    %p101 = scmp.eq.s32.totalorder %s18, 0
    %p102 = por %p100, %p101
    %p103 = scmp.ne.s32.totalorder %s91, %s92
    %p104 = scmp.eq.s32.totalorder %s19, 1
    %p105 = por %p103, %p104
    %p107 = scmp.ne.s32.totalorder %s92, %s106
    %p108 = scmp.eq.s32.totalorder %s19, 0
    %p109 = por %p107, %p108
    %s111 = sadd.s32 %s110, 1
    %p114 = scmp.eq.s32.totalorder %s13, 1
    %p115 = scmp.ne.s32.totalorder %s110, %s112
    %p116 = scmp.eq.s32.totalorder %s13, 0
    %p117 = por %p115, %p116
    %p118 = scmp.ne.s32.totalorder %s110, %s112
    %p119 = scmp.eq.s32.totalorder %s18, 1
    %p120 = por %p118, %p119
    %p121 = scmp.ne.s32.totalorder %s112, %s113
    %p122 = scmp.eq.s32.totalorder %s18, 0
    %p123 = por %p121, %p122
    %p124 = scmp.ne.s32.totalorder %s112, %s113
    %p125 = scmp.eq.s32.totalorder %s19, 1
    %p126 = por %p124, %p125
    %p128 = scmp.ne.s32.totalorder %s113, %s127
    %p129 = scmp.eq.s32.totalorder %s19, 0
    %p130 = por %p128, %p129
    %s132 = sadd.s32 %s131, 1
    %p135 = scmp.eq.s32.totalorder %s13, 1
    %p136 = scmp.ne.s32.totalorder %s131, %s133
    %p137 = scmp.eq.s32.totalorder %s13, 0
    %p138 = por %p136, %p137
    %p139 = scmp.ne.s32.totalorder %s131, %s133
    %p140 = scmp.eq.s32.totalorder %s18, 1
    %p141 = por %p139, %p140
    %p142 = scmp.ne.s32.totalorder %s133, %s134
    %p143 = scmp.eq.s32.totalorder %s18, 0
    %p144 = por %p142, %p143
    %p145 = scmp.ne.s32.totalorder %s133, %s134
    %p146 = scmp.eq.s32.totalorder %s19, 1
    %p147 = por %p145, %p146
    %p149 = scmp.ne.s32.totalorder %s134, %s148
    %p150 = scmp.eq.s32.totalorder %s19, 0
    %p151 = por %p149, %p150
    %s153 = sadd.s32 %s152, 1
    %p156 = scmp.eq.s32.totalorder %s13, 1
    %p157 = scmp.ne.s32.totalorder %s152, %s154
    %p158 = scmp.eq.s32.totalorder %s13, 0
    %p159 = por %p157, %p158
    %p160 = scmp.ne.s32.totalorder %s152, %s154
    %p161 = scmp.eq.s32.totalorder %s18, 1
    %p162 = por %p160, %p161
    %p163 = scmp.ne.s32.totalorder %s154, %s155
    %p164 = scmp.eq.s32.totalorder %s18, 0
    %p165 = por %p163, %p164
    %p166 = scmp.ne.s32.totalorder %s154, %s155
    %p167 = scmp.eq.s32.totalorder %s19, 1
    %p168 = por %p166, %p167
    %p170 = scmp.ne.s32.totalorder %s155, %s169
    %p171 = scmp.eq.s32.totalorder %s19, 0
    %p172 = por %p170, %p171
    %s173 = ssub.s32 %s13, %s20
    %p174 = scmp.eq.s32.totalorder %s173, 0
    %s176 = sadd.s32 %s175, 1
    %s177 = scalar_select %p174, %s175, %s176
    %p180 = pneg %p174
    %p181 = scmp.eq.s32.totalorder %s13, 1
    %p182 = por %p180, %p181
    %p183 = scmp.ne.s32.totalorder %s175, %s178
    %p184 = scmp.eq.s32.totalorder %s13, 0
    %p185 = por %p183, %p184
    %p186 = scmp.ne.s32.totalorder %s175, %s178
    %p187 = scmp.eq.s32.totalorder %s18, 1
    %p188 = por %p186, %p187
    %p189 = scmp.ne.s32.totalorder %s178, %s179
    %p190 = scmp.eq.s32.totalorder %s18, 0
    %p191 = por %p189, %p190
    %p192 = scmp.ne.s32.totalorder %s178, %s179
    %p193 = scmp.eq.s32.totalorder %s19, 1
    %p194 = por %p192, %p193
    %p196 = scmp.ne.s32.totalorder %s179, %s195
    %p197 = scmp.eq.s32.totalorder %s19, 0
    %p198 = por %p196, %p197
    %p199 = scmp.le.s32.totalorder 1, %s13
    %p200 = scmp.lt.s32.totalorder %s13, 3
    %p201 = pnand %p199, %p200
    %p202 = pneg %p201
    // Predicated region
    $region9: #{_lambda_.1} parent=5 // pred_check
      _
    $region10: #{_lambda_.1} parent=5 // pred_check_branch
      %204 = sbr.rel (%p201) target = $region12
    $region11: #{_lambda_.1} parent=5 // pred_region
      %s205 = ssub.s32 %s13, 1
      // Predicated region
      $region13: #{_lambda_.1} parent=11 // pred_check
        %p206 = pneg %p60
      $region14: #{_lambda_.1} parent=11 // pred_check_branch
        %208 = sbr.rel (%p206) target = $region16
      $region15: #{_lambda_.1} parent=11 // pred_region
        _
      $region16: #{_lambda_.1} parent=11 // pred_fallthru
        _
      // Predicated region
      $region17: #{_lambda_.1} parent=11 // pred_check
        %p209 = pneg %p81
      $region18: #{_lambda_.1} parent=11 // pred_check_branch
        %211 = sbr.rel (%p209) target = $region20
      $region19: #{_lambda_.1} parent=11 // pred_region
        _
      $region20: #{_lambda_.1} parent=11 // pred_fallthru
        _
      // Predicated region
      $region21: #{_lambda_.1} parent=11 // pred_check
        %p212 = pneg %p102
      $region22: #{_lambda_.1} parent=11 // pred_check_branch
        %214 = sbr.rel (%p212) target = $region24
      $region23: #{_lambda_.1} parent=11 // pred_region
        _
      $region24: #{_lambda_.1} parent=11 // pred_fallthru
        _
      // Predicated region
      $region25: #{_lambda_.1} parent=11 // pred_check
        %p215 = pneg %p123
      $region26: #{_lambda_.1} parent=11 // pred_check_branch
        %217 = sbr.rel (%p215) target = $region28
      $region27: #{_lambda_.1} parent=11 // pred_region
        _
      $region28: #{_lambda_.1} parent=11 // pred_fallthru
        _
      // Predicated region
      $region29: #{_lambda_.1} parent=11 // pred_check
        %p218 = pneg %p144
      $region30: #{_lambda_.1} parent=11 // pred_check_branch
        %220 = sbr.rel (%p218) target = $region32
      $region31: #{_lambda_.1} parent=11 // pred_region
        _
      $region32: #{_lambda_.1} parent=11 // pred_fallthru
        _
      // Predicated region
      $region33: #{_lambda_.1} parent=11 // pred_check
        %p221 = pneg %p165
      $region34: #{_lambda_.1} parent=11 // pred_check_branch
        %223 = sbr.rel (%p221) target = $region36
      $region35: #{_lambda_.1} parent=11 // pred_region
        _
      $region36: #{_lambda_.1} parent=11 // pred_fallthru
        _
    $region12: #{_lambda_.1} parent=5 // pred_fallthru
      _
    %p224 = scmp.lt.s32.totalorder %s13, 2
    // Predicated region
    $region37: #{_lambda_.1} parent=5 // pred_check
      %p225 = pneg %p224
    $region38: #{_lambda_.1} parent=5 // pred_check_branch
      %227 = sbr.rel (%p225) target = $region40
    $region39: #{_lambda_.1} parent=5 // pred_region
      // Predicated region
      $region41: #{_lambda_.1} parent=39 // pred_check
        %p228 = pneg %p33
      $region42: #{_lambda_.1} parent=39 // pred_check_branch
        %230 = sbr.rel (%p228) target = $region44
      $region43: #{_lambda_.1} parent=39 // pred_region
        %s231 = smul.u32 4, %s13
        %p232 = scmp.lt.s32.totalorder %s231, 7
        %s233 = scalar_select %p232, %s231, 7
        %s234 = smul.addr %s233, 8
        %s235 = scalar_lea.vmem %s0, %s234
        %s236 = smul.u32 4, %s13
      $region44: #{_lambda_.1} parent=39 // pred_fallthru
        _
    $region40: #{_lambda_.1} parent=5 // pred_fallthru
      _
    %p237 = scmp.le.s32.totalorder 1, %s13
    %p238 = scmp.lt.s32.totalorder %s13, 3
    %p239 = pnand %p237, %p238
    %p240 = pneg %p239
    // Predicated region
    $region45: #{_lambda_.1} parent=5 // pred_check
      _
    $region46: #{_lambda_.1} parent=5 // pred_check_branch
      %242 = sbr.rel (%p239) target = $region48
    $region47: #{_lambda_.1} parent=5 // pred_region
      %s243 = ssub.s32 %s13, 1
      %s244 = smul.u32 4, %s18
      %p245 = scmp.lt.s32.totalorder %s244, 7
      %s246 = scalar_select %p245, %s244, 7
      %s247 = smul.addr %s246, 8
      %s248 = scalar_lea.vmem %s0, %s247
      %p249 = pneg %p39
      %p250 = pneg %p36
      %p251 = pneg %p60
      %p252 = pneg %p57
      %p253 = pneg %p81
      %p254 = pneg %p78
      %p255 = pneg %p102
      %p256 = pneg %p99
      %p257 = pneg %p123
      %p258 = pneg %p120
      %p259 = pneg %p144
      %p260 = pneg %p141
      %p261 = pneg %p165
      %p262 = pneg %p162
      %p263 = pneg %p191
      %p264 = pneg %p188
      %s265 = smul.u32 4, %s18
      %p266 = scmp.lt.s32.totalorder %s265, 7
      %s267 = scalar_select %p266, %s265, 7
      %s268 = smul.addr %s267, 8
      %s269 = scalar_lea.vmem %s7, %s268
      %s270 = smul.u32 4, %s18
      %p271 = scmp.lt.s32.totalorder %s270, 7
      %s272 = scalar_select %p271, %s270, 7
      %s273 = smul.addr %s272, 8
      %s274 = scalar_lea.vmem %s0, %s273
      %s275 = smul.u32 4, %s18
      %s276 = smul.u32 4, %s18
      %p277 = scmp.lt.s32.totalorder %s276, 7
      %s278 = scalar_select %p277, %s276, 7
      %s279 = smul.addr %s278, 8
      %s280 = scalar_lea.vmem %s7, %s279
      %s281 = smul.u32 4, %s18
      %v283 = vld [vmem:[%s274] sm:$0xff]
      %v284 = vld [vmem:[%s274 + $0x8] sm:$0xff]
      %v285 = vld [vmem:[%s274 + $0x10] sm:$0xff]
      %v286 = vld [vmem:[%s274 + $0x18] sm:$0xff]
      %v287 = vpack.c.bf16 %v284, %v283
      %v288 = vpack.c.bf16 %v286, %v285
      %v289 = vld [vmem:[%s1] sm:$0xf]
      %v290 = vld [vmem:[%s1 + $0x4] sm:$0xf]
      %v291 = vld [vmem:[%s1 + $0x8] sm:$0xf]
      %v292 = vld [vmem:[%s1 + $0xc] sm:$0xf]
      %v293 = vld [vmem:[%s2] sm:$0x1]
      %v295 = vlaneseq
      %v296 = vshrl.u32 %v295, 7
      %v297 = vsub.s32 0, %v296
      %v298 = vrot.slane %v293, %v297
      %v304 = vunpack.c.l.b16 %v289
      %v305 = vunpack.c.l.b16 %v290
      %v306 = vunpack.c.l.b16 %v291
      %v307 = vunpack.c.l.b16 %v292
      %v308 = vpack.c.b16 %v305, %v304
      %v309 = vpack.c.b16 %v307, %v306
      %vm312 = vcmask 261120
      %v314 = vsel %vm312, %v287, 0
      %v317 = vsel %vm312, %v288, 0
      %319 = vmatprep.subr.bf16.mxu0 0
      %320 = vmatpush1.bf16.msra.mxu0 %v308
      %321 = vmatprep.subr.bf16.mxu0 0
      %322 = vmatpush1.bf16.msra.mxu0 %v309
      %323 = vmatprep.subr.bf16.mxu0 0
      %324 = vmatpush1.bf16.msra.mxu0 0
      %325 = vmatprep.subr.bf16.mxu0 0
      %326 = vmatpush1.bf16.msra.mxu0 0
      %327 = vmatprep.subr.bf16.mxu0 0
      %328 = vmatpush1.bf16.msra.mxu0 0
      %329 = vmatprep.subr.bf16.mxu0 0
      %330 = vmatpush1.bf16.msra.mxu0 0
      %331 = vmatprep.subr.bf16.mxu0 0
      %332 = vmatpush1.bf16.msra.mxu0 0
      %333 = vmatprep.subr.bf16.mxu0 0
      %334 = vmatpush1.bf16.msra.mxu0 0
      %335 = vmatprep.subr.bf16.mxu0 0
      %336 = vmatpush1.bf16.msra.mxu0 0
      %337 = vmatprep.subr.bf16.mxu0 0
      %338 = vmatpush1.bf16.msra.mxu0 0
      %339 = vmatprep.subr.bf16.mxu0 0
      %340 = vmatpush1.bf16.msra.mxu0 0
      %341 = vmatprep.subr.bf16.mxu0 0
      %342 = vmatpush1.bf16.msra.mxu0 0
      %343 = vmatprep.subr.bf16.mxu0 0
      %344 = vmatpush1.bf16.msra.mxu0 0
      %345 = vmatprep.subr.bf16.mxu0 0
      %346 = vmatpush1.bf16.msra.mxu0 0
      %347 = vmatprep.subr.bf16.mxu0 0
      %348 = vmatpush1.bf16.msra.mxu0 0
      %349 = vmatprep.subr.bf16.mxu0 0
      %350 = vmatpush1.bf16.msra.mxu0 0
      %351 = vmatprep.mubr.bf16.mxu0 0
      %352 = vmatmul.mubr.bf16.gmra.mrb[0].mxu0 %v314
      %v353 = vpop.f32.mrb[0].mxu0
      %v354 = vadd.f32 %v298, %v353
      %v355 = vpop.f32.mrb[0].mxu0
      %v356 = vpop.f32.mrb[0].mxu0
      %v357 = vadd.f32 %v298, %v356
      %v358 = vpop.f32.mrb[0].mxu0
      %359 = vmatprep.mubr.bf16.mxu0 0
      %360 = vmatmul.mubr.bf16.gmra.mrb[0].mxu0 %v317
      %v361 = vpop.f32.mrb[0].mxu0
      %v362 = vadd.f32 %v298, %v361
      %v363 = vpop.f32.mrb[0].mxu0
      %v364 = vpop.f32.mrb[0].mxu0
      %v365 = vadd.f32 %v298, %v364
      %v366 = vpop.f32.mrb[0].mxu0
      %367 = vdwg.mxu0
      %v368 = vmax.f32 %v354, 0.0
      %v369 = vmax.f32 %v357, 0.0
      %v370 = vmax.f32 %v362, 0.0
      %v371 = vmax.f32 %v365, 0.0
      %v372 = vld [vmem:[%s3] sm:$0xf]
      %v373 = vld [vmem:[%s3 + $0x4] sm:$0xf]
      %v374 = vld [vmem:[%s3 + $0x8] sm:$0xf]
      %v375 = vld [vmem:[%s3 + $0xc] sm:$0xf]
      %v376 = vld [vmem:[%s4] sm:$0x1]
      %v377 = vpack.c.bf16 %v369, %v368
      %v378 = vpack.c.bf16 %v371, %v370
      %v380 = vlaneseq
      %v381 = vshrl.u32 %v380, 7
      %v382 = vsub.s32 0, %v381
      %v383 = vrot.slane %v376, %v382
      %v389 = vunpack.c.l.b16 %v372
      %v390 = vunpack.c.l.b16 %v373
      %v391 = vunpack.c.l.b16 %v374
      %v392 = vunpack.c.l.b16 %v375
      %v393 = vpack.c.b16 %v390, %v389
      %v394 = vpack.c.b16 %v392, %v391
      %v398 = vsel %vm312, %v377, 0
      %v401 = vsel %vm312, %v378, 0
      %403 = vmatprep.subr.bf16.mxu0 0
      %404 = vmatpush1.bf16.msra.mxu0 %v393
      %405 = vmatprep.subr.bf16.mxu0 0
      %406 = vmatpush1.bf16.msra.mxu0 %v394
      %407 = vmatprep.subr.bf16.mxu0 0
      %408 = vmatpush1.bf16.msra.mxu0 0
      %409 = vmatprep.subr.bf16.mxu0 0
      %410 = vmatpush1.bf16.msra.mxu0 0
      %411 = vmatprep.subr.bf16.mxu0 0
      %412 = vmatpush1.bf16.msra.mxu0 0
      %413 = vmatprep.subr.bf16.mxu0 0
      %414 = vmatpush1.bf16.msra.mxu0 0
      %415 = vmatprep.subr.bf16.mxu0 0
      %416 = vmatpush1.bf16.msra.mxu0 0
      %417 = vmatprep.subr.bf16.mxu0 0
      %418 = vmatpush1.bf16.msra.mxu0 0
      %419 = vmatprep.subr.bf16.mxu0 0
      %420 = vmatpush1.bf16.msra.mxu0 0
      %421 = vmatprep.subr.bf16.mxu0 0
      %422 = vmatpush1.bf16.msra.mxu0 0
      %423 = vmatprep.subr.bf16.mxu0 0
      %424 = vmatpush1.bf16.msra.mxu0 0
      %425 = vmatprep.subr.bf16.mxu0 0
      %426 = vmatpush1.bf16.msra.mxu0 0
      %427 = vmatprep.subr.bf16.mxu0 0
      %428 = vmatpush1.bf16.msra.mxu0 0
      %429 = vmatprep.subr.bf16.mxu0 0
      %430 = vmatpush1.bf16.msra.mxu0 0
      %431 = vmatprep.subr.bf16.mxu0 0
      %432 = vmatpush1.bf16.msra.mxu0 0
      %433 = vmatprep.subr.bf16.mxu0 0
      %434 = vmatpush1.bf16.msra.mxu0 0
      %435 = vmatprep.mubr.bf16.mxu0 0
      %436 = vmatmul.mubr.bf16.gmra.mrb[0].mxu0 %v398
      %v437 = vpop.f32.mrb[0].mxu0
      %v438 = vadd.f32 %v383, %v437
      %v439 = vpop.f32.mrb[0].mxu0
      %v440 = vpop.f32.mrb[0].mxu0
      %v441 = vadd.f32 %v383, %v440
      %v442 = vpop.f32.mrb[0].mxu0
      %443 = vmatprep.mubr.bf16.mxu0 0
      %444 = vmatmul.mubr.bf16.gmra.mrb[0].mxu0 %v401
      %v445 = vpop.f32.mrb[0].mxu0
      %v446 = vadd.f32 %v383, %v445
      %v447 = vpop.f32.mrb[0].mxu0
      %v448 = vpop.f32.mrb[0].mxu0
      %v449 = vadd.f32 %v383, %v448
      %v450 = vpop.f32.mrb[0].mxu0
      %451 = vdwg.mxu0
      %v452 = vmax.f32 %v438, 0.0
      %v453 = vmax.f32 %v441, 0.0
      %v454 = vmax.f32 %v446, 0.0
      %v455 = vmax.f32 %v449, 0.0
      %s456 = scalar_lea.vmem %s3, 16
      %v457 = vld [vmem:[%s456] sm:$0xf]
      %v458 = vld [vmem:[%s456 + $0x4] sm:$0xf]
      %v459 = vld [vmem:[%s456 + $0x8] sm:$0xf]
      %v460 = vld [vmem:[%s456 + $0xc] sm:$0xf]
      %s461 = scalar_lea.vmem %s4, 1
      %v462 = vld [vmem:[%s461] sm:$0x1]
      %v463 = vpack.c.bf16 %v453, %v452
      %v464 = vpack.c.bf16 %v455, %v454
      %v466 = vlaneseq
      %v467 = vshrl.u32 %v466, 7
      %v468 = vsub.s32 0, %v467
      %v469 = vrot.slane %v462, %v468
      %v475 = vunpack.c.l.b16 %v457
      %v476 = vunpack.c.l.b16 %v458
      %v477 = vunpack.c.l.b16 %v459
      %v478 = vunpack.c.l.b16 %v460
      %v479 = vpack.c.b16 %v476, %v475
      %v480 = vpack.c.b16 %v478, %v477
      %v484 = vsel %vm312, %v463, 0
      %v487 = vsel %vm312, %v464, 0
      %489 = vmatprep.subr.bf16.mxu0 0
      %490 = vmatpush1.bf16.msra.mxu0 %v479
      %491 = vmatprep.subr.bf16.mxu0 0
      %492 = vmatpush1.bf16.msra.mxu0 %v480
      %493 = vmatprep.subr.bf16.mxu0 0
      %494 = vmatpush1.bf16.msra.mxu0 0
      %495 = vmatprep.subr.bf16.mxu0 0
      %496 = vmatpush1.bf16.msra.mxu0 0
      %497 = vmatprep.subr.bf16.mxu0 0
      %498 = vmatpush1.bf16.msra.mxu0 0
      %499 = vmatprep.subr.bf16.mxu0 0
      %500 = vmatpush1.bf16.msra.mxu0 0
      %501 = vmatprep.subr.bf16.mxu0 0
      %502 = vmatpush1.bf16.msra.mxu0 0
      %503 = vmatprep.subr.bf16.mxu0 0
      %504 = vmatpush1.bf16.msra.mxu0 0
      %505 = vmatprep.subr.bf16.mxu0 0
      %506 = vmatpush1.bf16.msra.mxu0 0
      %507 = vmatprep.subr.bf16.mxu0 0
      %508 = vmatpush1.bf16.msra.mxu0 0
      %509 = vmatprep.subr.bf16.mxu0 0
      %510 = vmatpush1.bf16.msra.mxu0 0
      %511 = vmatprep.subr.bf16.mxu0 0
      %512 = vmatpush1.bf16.msra.mxu0 0
      %513 = vmatprep.subr.bf16.mxu0 0
      %514 = vmatpush1.bf16.msra.mxu0 0
      %515 = vmatprep.subr.bf16.mxu0 0
      %516 = vmatpush1.bf16.msra.mxu0 0
      %517 = vmatprep.subr.bf16.mxu0 0
      %518 = vmatpush1.bf16.msra.mxu0 0
      %519 = vmatprep.subr.bf16.mxu0 0
      %520 = vmatpush1.bf16.msra.mxu0 0
      %521 = vmatprep.mubr.bf16.mxu0 0
      %522 = vmatmul.mubr.bf16.gmra.mrb[0].mxu0 %v484
      %v523 = vpop.f32.mrb[0].mxu0
      %v524 = vadd.f32 %v469, %v523
      %v525 = vpop.f32.mrb[0].mxu0
      %v526 = vpop.f32.mrb[0].mxu0
      %v527 = vadd.f32 %v469, %v526
      %v528 = vpop.f32.mrb[0].mxu0
      %529 = vmatprep.mubr.bf16.mxu0 0
      %530 = vmatmul.mubr.bf16.gmra.mrb[0].mxu0 %v487
      %v531 = vpop.f32.mrb[0].mxu0
      %v532 = vadd.f32 %v469, %v531
      %v533 = vpop.f32.mrb[0].mxu0
      %v534 = vpop.f32.mrb[0].mxu0
      %v535 = vadd.f32 %v469, %v534
      %v536 = vpop.f32.mrb[0].mxu0
      %537 = vdwg.mxu0
      %v538 = vmax.f32 %v524, 0.0
      %v539 = vmax.f32 %v527, 0.0
      %v540 = vmax.f32 %v532, 0.0
      %v541 = vmax.f32 %v535, 0.0
      %v542 = vpack.c.bf16 %v539, %v538
      %v543 = vpack.c.bf16 %v541, %v540
      %v544 = vld [vmem:[%s5] sm:$0xf]
      %v545 = vld [vmem:[%s5 + $0x4] sm:$0xf]
      %v546 = vld [vmem:[%s5 + $0x8] sm:$0xf]
      %v547 = vld [vmem:[%s5 + $0xc] sm:$0xf]
      %v548 = vld [vmem:[%s6] sm:$0x1]
      %v550 = vlaneseq
      %v551 = vshrl.u32 %v550, 7
      %v552 = vsub.s32 0, %v551
      %v553 = vrot.slane %v548, %v552
      %v559 = vunpack.c.l.b16 %v544
      %v560 = vunpack.c.l.b16 %v545
      %v561 = vunpack.c.l.b16 %v546
      %v562 = vunpack.c.l.b16 %v547
      %v563 = vpack.c.b16 %v560, %v559
      %v564 = vpack.c.b16 %v562, %v561
      %v568 = vsel %vm312, %v542, 0
      %v571 = vsel %vm312, %v543, 0
      %573 = vmatprep.subr.bf16.mxu0 0
      %574 = vmatpush1.bf16.msra.mxu0 %v563
      %575 = vmatprep.subr.bf16.mxu0 0
      %576 = vmatpush1.bf16.msra.mxu0 %v564
      %577 = vmatprep.subr.bf16.mxu0 0
      %578 = vmatpush1.bf16.msra.mxu0 0
      %579 = vmatprep.subr.bf16.mxu0 0
      %580 = vmatpush1.bf16.msra.mxu0 0
      %581 = vmatprep.subr.bf16.mxu0 0
      %582 = vmatpush1.bf16.msra.mxu0 0
      %583 = vmatprep.subr.bf16.mxu0 0
      %584 = vmatpush1.bf16.msra.mxu0 0
      %585 = vmatprep.subr.bf16.mxu0 0
      %586 = vmatpush1.bf16.msra.mxu0 0
      %587 = vmatprep.subr.bf16.mxu0 0
      %588 = vmatpush1.bf16.msra.mxu0 0
      %589 = vmatprep.subr.bf16.mxu0 0
      %590 = vmatpush1.bf16.msra.mxu0 0
      %591 = vmatprep.subr.bf16.mxu0 0
      %592 = vmatpush1.bf16.msra.mxu0 0
      %593 = vmatprep.subr.bf16.mxu0 0
      %594 = vmatpush1.bf16.msra.mxu0 0
      %595 = vmatprep.subr.bf16.mxu0 0
      %596 = vmatpush1.bf16.msra.mxu0 0
      %597 = vmatprep.subr.bf16.mxu0 0
      %598 = vmatpush1.bf16.msra.mxu0 0
      %599 = vmatprep.subr.bf16.mxu0 0
      %600 = vmatpush1.bf16.msra.mxu0 0
      %601 = vmatprep.subr.bf16.mxu0 0
      %602 = vmatpush1.bf16.msra.mxu0 0
      %603 = vmatprep.subr.bf16.mxu0 0
      %604 = vmatpush1.bf16.msra.mxu0 0
      %605 = vmatprep.mubr.bf16.mxu0 0
      %606 = vmatmul.mubr.bf16.gmra.mrb[0].mxu0 %v568
      %v607 = vpop.f32.mrb[0].mxu0
      %v608 = vadd.f32 %v553, %v607
      %v609 = vpop.f32.mrb[0].mxu0
      %v610 = vpop.f32.mrb[0].mxu0
      %v611 = vadd.f32 %v553, %v610
      %v612 = vpop.f32.mrb[0].mxu0
      %613 = vmatprep.mubr.bf16.mxu0 0
      %614 = vmatmul.mubr.bf16.gmra.mrb[0].mxu0 %v571
      %v615 = vpop.f32.mrb[0].mxu0
      %v616 = vadd.f32 %v553, %v615
      %v617 = vpop.f32.mrb[0].mxu0
      %v618 = vpop.f32.mrb[0].mxu0
      %v619 = vadd.f32 %v553, %v618
      %v620 = vpop.f32.mrb[0].mxu0
      %621 = vdwg.mxu0
      %vm622 = vcmask 64512
      %623 = vst.msk [vmem:[%s280] sm:$0xff] %vm622, %v608
      %624 = vst.msk [vmem:[%s280 + $0x8] sm:$0xff] %vm622, %v611
      %625 = vst.msk [vmem:[%s280 + $0x10] sm:$0xff] %vm622, %v616
      %626 = vst.msk [vmem:[%s280 + $0x18] sm:$0xff] %vm622, %v619
      %s627 = smul.u32 4, %s18
      %p628 = scmp.lt.s32.totalorder %s627, 7
      %s629 = scalar_select %p628, %s627, 7
      %s630 = smul.addr %s629, 8
      %s631 = scalar_lea.vmem %s7, %s630
      // Predicated region
      $region49: #{_lambda_.1} parent=47 // pred_check
        %p632 = pneg %p188
      $region50: #{_lambda_.1} parent=47 // pred_check_branch
        %634 = sbr.rel (%p632) target = $region52
      $region51: #{_lambda_.1} parent=47 // pred_region
        %s635 = smul.u32 4, %s18
      $region52: #{_lambda_.1} parent=47 // pred_fallthru
        _
    $region48: #{_lambda_.1} parent=5 // pred_fallthru
      _
    %p636 = scmp.le.s32.totalorder 2, %s13
    // Predicated region
    $region53: #{_lambda_.1} parent=5 // pred_check
      %p637 = pneg %p636
    $region54: #{_lambda_.1} parent=5 // pred_check_branch
      %639 = sbr.rel (%p637) target = $region56
    $region55: #{_lambda_.1} parent=5 // pred_region
      %s640 = ssub.s32 %s13, 2
      // Predicated region
      $region57: #{_lambda_.1} parent=55 // pred_check
        %p641 = pneg %p194
      $region58: #{_lambda_.1} parent=55 // pred_check_branch
        %643 = sbr.rel (%p641) target = $region60
      $region59: #{_lambda_.1} parent=55 // pred_region
        %s644 = smul.u32 4, %s19
        %p645 = scmp.lt.s32.totalorder %s644, 7
        %s646 = scalar_select %p645, %s644, 7
        %s647 = smul.addr %s646, 8
        %s648 = scalar_lea.vmem %s7, %s647
      $region60: #{_lambda_.1} parent=55 // pred_fallthru
        _
    $region56: #{_lambda_.1} parent=5 // pred_fallthru
      _
  $region6: #{_lambda_.1} parent=0 // loop_footer
    %s17 = sadd.s32 1, %s13
  $region7: #{_lambda_.1} parent=0 // loop_footer_branch
    %12 = sbr.rel target = $region3
  $region8: #{_lambda_.1} parent=0 // loop_exit
    _

</llo_original>
